<compile_context>
chip_gen: v7x
topology: tpu7x:2x2x1
jax: 0.10.0
libtpu: 0.0.40
codegen_flags: <defaults>
</compile_context>

<pallas_src>
import functools

import jax
import jax.numpy as jnp
from jax.experimental import pallas as pl
from jax.experimental.pallas import tpu as pltpu

# ----------------------------- config (small demo) --------------------------
B = 2            # batch
S = 8            # sequence length
H = 32           # hidden_size
LN_EPS = 1e-12   # config.layer_norm_eps (BERT default)

TM_TARGET = 256  # M-tile target for production-sized runs (256-512 sweet spot)


def _round_up(a, b):
    return (a + b - 1) // b * b


# ------------------------------- kernel -------------------------------------
def _self_output_kernel(x_ref, r_ref, w_ref, p_ref, o_ref, *, eps, inv_h, precision):
    """Fused: (x @ w + b) -> +residual -> LayerNorm(gamma, beta).

    x, r: [tm, Hp]   activations / residual (native dtype, cast in-kernel)
    w   : [Hp, Hp]   dense weight [in, out], VMEM-resident across the grid
    p   : [3, Hp]    row 0 = dense bias, row 1 = LN gamma, row 2 = LN beta
    Dropout is identity (eval-mode semantics).
    """
    # MXU matmul with f32 accumulation; in-kernel casts are free under the MXU.
    y = jnp.dot(x_ref[...], w_ref[...],
                preferred_element_type=jnp.float32, precision=precision)

    b = p_ref[0:1, :].astype(jnp.float32)
    g = p_ref[1:2, :].astype(jnp.float32)
    beta = p_ref[2:3, :].astype(jnp.float32)

    h = y + b + r_ref[...].astype(jnp.float32)

    # One-pass LN statistics: the two lane-reductions are independent (overlap
    # in the XLU).  Padded H columns are exactly zero, so dividing by the TRUE
    # H keeps mean/var correct without masks.
    s1 = jnp.sum(h, axis=-1, keepdims=True)
    s2 = jnp.sum(h * h, axis=-1, keepdims=True)
    mu = s1 * inv_h
    var = jnp.maximum(s2 * inv_h - mu * mu, 0.0)   # biased var == PyTorch LN

    o_ref[...] = ((h - mu) * jax.lax.rsqrt(var + eps) * g + beta).astype(o_ref.dtype)


# ------------------------------ parameter prep -------------------------------
def init_params(key, h=H):
    kw, kb = jax.random.split(key)
    return dict(
        dense_w=jax.random.normal(kw, (h, h), jnp.float32) * 0.02,  # [in, out]
        dense_b=jax.random.normal(kb, (h,), jnp.float32) * 0.02,
        ln_g=jnp.ones((h,), jnp.float32),
        ln_b=jnp.zeros((h,), jnp.float32),
    )


def prepare_params(params):
    """One-time packing: pad H to a multiple of 128 (lane-dense) and coalesce
    the three per-H vectors into a single (3, Hp) array (one DMA, one spec)."""
    h = params["dense_w"].shape[0]
    hp = _round_up(h, 128)
    w = jnp.zeros((hp, hp), jnp.float32).at[:h, :h].set(params["dense_w"])
    vecs = jnp.zeros((3, hp), jnp.float32)
    vecs = vecs.at[0, :h].set(params["dense_b"])
    vecs = vecs.at[1, :h].set(params["ln_g"])
    vecs = vecs.at[2, :h].set(params["ln_b"])
    return dict(w=w, vecs=vecs, h=h)


# ------------------------------ wrapper --------------------------------------
def bert_self_output(hidden_states, input_tensor, packed, *, tm_target=TM_TARGET):
    """hidden_states, input_tensor: [B, S, H]  ->  [B, S, H]."""
    Bb, Ss, h = hidden_states.shape
    assert h == packed["h"]
    hp = packed["w"].shape[0]

    M = Bb * Ss
    tm = min(tm_target, _round_up(M, 8))
    Mp = _round_up(M, tm)

    x2 = hidden_states.reshape(M, h)          # no dtype cast in the wrapper
    r2 = input_tensor.reshape(M, h)
    if (Mp, hp) != (M, h):
        # Layout plumbing only; a no-op for production shapes (H=768/1024,
        # M a multiple of the tile).
        x2 = jnp.pad(x2, ((0, Mp - M), (0, hp - h)))
        r2 = jnp.pad(r2, ((0, Mp - M), (0, hp - h)))

    precision = (jax.lax.Precision.HIGHEST
                 if x2.dtype == jnp.float32 else None)
    kernel = functools.partial(_self_output_kernel,
                               eps=LN_EPS, inv_h=1.0 / h, precision=precision)

    out = pl.pallas_call(
        kernel,
        out_shape=jax.ShapeDtypeStruct((Mp, hp), hidden_states.dtype),
        grid=(Mp // tm,),
        in_specs=[
            pl.BlockSpec((tm, hp), lambda i: (i, 0)),   # x tile (double-buffered)
            pl.BlockSpec((tm, hp), lambda i: (i, 0)),   # residual tile
            pl.BlockSpec((hp, hp), lambda i: (0, 0)),   # weight: fetched once, VMEM-resident
            pl.BlockSpec((3, hp), lambda i: (0, 0)),    # [bias; gamma; beta] coalesced
        ],
        out_specs=pl.BlockSpec((tm, hp), lambda i: (i, 0)),
        compiler_params=pltpu.CompilerParams(
            dimension_semantics=("parallel",),          # megacore sharding on v7x
        ),
    )(x2, r2, packed["w"], packed["vecs"])

    return out[:M, :h].reshape(Bb, Ss, h)


# ---------------------------------- main --------------------------------------
if __name__ == "__main__":
    key = jax.random.PRNGKey(0)
    k_param, k_h, k_r = jax.random.split(key, 3)
    params = init_params(k_param)
    packed = prepare_params(params)   # one-time, outside the jitted forward

    hidden_states = jax.random.normal(k_h, (B, S, H), jnp.float32)
    input_tensor = jax.random.normal(k_r, (B, S, H), jnp.float32)

    # TODO(synk): nn.Dropout is treated as identity (eval mode); training-mode
    # dropout would need in-kernel pltpu.prng_seed / prng_random_bits.
    fwd = jax.jit(lambda hs, it: bert_self_output(hs, it, packed))
    out = fwd(hidden_states, input_tensor)
    jax.block_until_ready(out)

    # Pure-JAX reference of the same math.
    href = jnp.dot(hidden_states.reshape(-1, H), params["dense_w"],
                   precision=jax.lax.Precision.HIGHEST) + params["dense_b"]
    href = href + input_tensor.reshape(-1, H)
    mu = href.mean(-1, keepdims=True)
    var = ((href - mu) ** 2).mean(-1, keepdims=True)
    ref = ((href - mu) * jax.lax.rsqrt(var + LN_EPS) * params["ln_g"]
           + params["ln_b"]).reshape(B, S, H)

    assert out.shape == (B, S, H) and out.dtype == jnp.float32
    assert jnp.allclose(out, ref, atol=1e-5, rtol=1e-5)
    print("KERNEL_OK")
</pallas_src>

<mosaic_0001>
module attributes {stable_mosaic.version = 11 : i64} {
  func.func @_self_output_kernel(%arg0: i32, %arg1: memref<16x128xf32, #tpu.memory_space<vmem>>, %arg2: memref<16x128xf32, #tpu.memory_space<vmem>>, %arg3: memref<128x128xf32, #tpu.memory_space<vmem>>, %arg4: memref<3x128xf32, #tpu.memory_space<vmem>>, %arg5: memref<16x128xf32, #tpu.memory_space<vmem>>) attributes {dimension_semantics = [#tpu.dimension_semantics<parallel>], iteration_bounds = array<i64: 1>, scalar_prefetch = 0 : i64, scratch_operands = 0 : i64, tpu.core_type = #tpu.core_type<tc>, window_params = [{transform_indices = @transform_0, window_bounds = array<i64: 16, 128>}, {transform_indices = @transform_1, window_bounds = array<i64: 16, 128>}, {pipeline_mode = #tpu.pipeline_mode<synchronous>, transform_indices = @transform_2, window_bounds = array<i64: 128, 128>}, {pipeline_mode = #tpu.pipeline_mode<synchronous>, transform_indices = @transform_3, window_bounds = array<i64: 3, 128>}, {transform_indices = @transform_4, window_bounds = array<i64: 16, 128>}]} {
    %c0 = arith.constant 0 : index
    %c0_0 = arith.constant 0 : index
    %0 = vector.load %arg1[%c0, %c0_0] : memref<16x128xf32, #tpu.memory_space<vmem>>, vector<16x128xf32>
    %c0_1 = arith.constant 0 : index
    %c0_2 = arith.constant 0 : index
    %1 = vector.load %arg3[%c0_1, %c0_2] : memref<128x128xf32, #tpu.memory_space<vmem>>, vector<128x128xf32>
    %cst = arith.constant dense<0.000000e+00> : vector<16x128xf32>
    %2 = tpu.matmul %0, %1, %cst {dimension_numbers = #tpu.dot_dimension_numbers<[1], [0], [0], [1], [0, 0, 1, 1], [], []>, precision = #tpu.contract_precision<fp32>} : vector<16x128xf32>, vector<128x128xf32>, vector<16x128xf32> -> vector<16x128xf32>
    %c0_3 = arith.constant 0 : index
    %c0_4 = arith.constant 0 : index
    %3 = vector.load %arg4[%c0_3, %c0_4] : memref<3x128xf32, #tpu.memory_space<vmem>>, vector<1x128xf32>
    %c1 = arith.constant 1 : index
    %c0_5 = arith.constant 0 : index
    %4 = vector.load %arg4[%c1, %c0_5] : memref<3x128xf32, #tpu.memory_space<vmem>>, vector<1x128xf32>
    %c2 = arith.constant 2 : index
    %c0_6 = arith.constant 0 : index
    %5 = vector.load %arg4[%c2, %c0_6] : memref<3x128xf32, #tpu.memory_space<vmem>>, vector<1x128xf32>
    %6 = vector.broadcast %3 : vector<1x128xf32> to vector<16x128xf32>
    %7 = arith.addf %2, %6 : vector<16x128xf32>
    %c0_7 = arith.constant 0 : index
    %c0_8 = arith.constant 0 : index
    %8 = vector.load %arg2[%c0_7, %c0_8] : memref<16x128xf32, #tpu.memory_space<vmem>>, vector<16x128xf32>
    %9 = arith.addf %7, %8 : vector<16x128xf32>
    %cst_9 = arith.constant dense<0.000000e+00> : vector<16xf32>
    %10 = vector.multi_reduction <add>, %9, %cst_9 [1] : vector<16x128xf32> to vector<16xf32>
    %11 = vector.shape_cast %10 : vector<16xf32> to vector<16x1xf32>
    %12 = arith.mulf %9, %9 : vector<16x128xf32>
    %cst_10 = arith.constant dense<0.000000e+00> : vector<16xf32>
    %13 = vector.multi_reduction <add>, %12, %cst_10 [1] : vector<16x128xf32> to vector<16xf32>
    %14 = vector.shape_cast %13 : vector<16xf32> to vector<16x1xf32>
    %cst_11 = arith.constant 3.125000e-02 : f32
    %15 = vector.broadcast %cst_11 : f32 to vector<16x1xf32>
    %16 = arith.mulf %11, %15 : vector<16x1xf32>
    %cst_12 = arith.constant 3.125000e-02 : f32
    %17 = vector.broadcast %cst_12 : f32 to vector<16x1xf32>
    %18 = arith.mulf %14, %17 : vector<16x1xf32>
    %19 = arith.mulf %16, %16 : vector<16x1xf32>
    %20 = arith.subf %18, %19 : vector<16x1xf32>
    %cst_13 = arith.constant 0.000000e+00 : f32
    %21 = vector.broadcast %cst_13 : f32 to vector<16x1xf32>
    %22 = arith.maximumf %20, %21 : vector<16x1xf32>
    %23 = vector.broadcast %16 : vector<16x1xf32> to vector<16x128xf32>
    %24 = arith.subf %9, %23 : vector<16x128xf32>
    %cst_14 = arith.constant 9.99999996E-13 : f32
    %25 = vector.broadcast %cst_14 : f32 to vector<16x1xf32>
    %26 = arith.addf %22, %25 : vector<16x1xf32>
    %27 = math.rsqrt %26 : vector<16x1xf32>
    %28 = vector.broadcast %27 : vector<16x1xf32> to vector<16x128xf32>
    %29 = arith.mulf %24, %28 : vector<16x128xf32>
    %30 = vector.broadcast %4 : vector<1x128xf32> to vector<16x128xf32>
    %31 = arith.mulf %29, %30 : vector<16x128xf32>
    %32 = vector.broadcast %5 : vector<1x128xf32> to vector<16x128xf32>
    %33 = arith.addf %31, %32 : vector<16x128xf32>
    %c0_15 = arith.constant 0 : index
    %c0_16 = arith.constant 0 : index
    %34 = vector.load %arg5[%c0_15, %c0_16] : memref<16x128xf32, #tpu.memory_space<vmem>>, vector<16x128xf32>
    tpu.vector_store %arg5[%c0_15, %c0_16], %33 {strides = array<i32>} : memref<16x128xf32, #tpu.memory_space<vmem>>, vector<16x128xf32>,
    return
  }
  func.func @transform_0(%arg0: i32) -> (i32, i32) {
    %c0_i32 = arith.constant 0 : i32
    %c0_i32_0 = arith.constant 0 : i32
    return %arg0, %c0_i32 : i32, i32
  }
  func.func @transform_1(%arg0: i32) -> (i32, i32) {
    %c0_i32 = arith.constant 0 : i32
    %c0_i32_0 = arith.constant 0 : i32
    return %arg0, %c0_i32 : i32, i32
  }
  func.func @transform_2(%arg0: i32) -> (i32, i32) {
    %c0_i32 = arith.constant 0 : i32
    %c0_i32_0 = arith.constant 0 : i32
    %c0_i32_1 = arith.constant 0 : i32
    return %c0_i32, %c0_i32_0 : i32, i32
  }
  func.func @transform_3(%arg0: i32) -> (i32, i32) {
    %c0_i32 = arith.constant 0 : i32
    %c0_i32_0 = arith.constant 0 : i32
    %c0_i32_1 = arith.constant 0 : i32
    return %c0_i32, %c0_i32_0 : i32, i32
  }
  func.func @transform_4(%arg0: i32) -> (i32, i32) {
    %c0_i32 = arith.constant 0 : i32
    %c0_i32_0 = arith.constant 0 : i32
    return %arg0, %c0_i32 : i32, i32
  }
}

</mosaic_0001>

<llo_original>
// kernel: _lambda_.1
$region0: #{_lambda_.1}
  #allocation0 [shape = 'u32[]', space=smem, size = 0x4, offset = 0x4, fixed_abs, tag = 'smem constant byte address 0x4 - core index']
  #allocation1 [shape = 'u32[144,128]{1,0:T(1,128)}', space=vmem, size = 0x12000, scoped, tag = 'internal scratch']
  %s0 = inlined_call_operand.vmem [shape: f32[16,128], index: 0, kind: input, shape index: {}]
  %s1 = inlined_call_operand.vmem [shape: f32[16,128], index: 1, kind: input, shape index: {}]
  %s2 = inlined_call_operand.hbm [shape: f32[128,128], index: 2, kind: input, shape index: {}]
  %s3 = inlined_call_operand.vmem [shape: f32[3,128], index: 3, kind: input, shape index: {}]
  %s4 = inlined_call_operand.vmem [shape: f32[16,128], index: 4, kind: output, shape index: {}]
  %s5 = sld [smem:[#allocation0]]
  $region30: #{_lambda_.1} parent=0
    _
  %s7 = ssub.s32 1, %s5
  %s8 = scalar_select 0, %s7, %s5
  $region1: #{_lambda_.1} parent=0
    #allocation2 [shape = 'u8[65536]{0}', space=vmem, size = 0x10000, scoped, tag = 'input window, operand 2, single buffered']
    #allocation3 [shape = 's32[1]{0}', space=sflag, size = 0x4, scoped, tag = 'scoped memory for _lambda_.1']
    %9 = vsyncpa [#allocation3], 0
    // Predicated region
    $region2: #{_lambda_.1} parent=1 // pred_check
      _
    $region3: #{_lambda_.1} parent=1 // pred_check_branch
      %11 = sbr.rel (0) target = $region5
    $region4: #{_lambda_.1} parent=1 // pred_region
      _
    $region5: #{_lambda_.1} parent=1 // pred_fallthru
      _
    // Predicated region
    $region6: #{_lambda_.1} parent=1 // pred_check
      _
    $region7: #{_lambda_.1} parent=1 // pred_check_branch
      %13 = sbr.rel (0) target = $region9
    $region8: #{_lambda_.1} parent=1 // pred_region
      _
    $region9: #{_lambda_.1} parent=1 // pred_fallthru
      _
    // Predicated region
    $region10: #{_lambda_.1} parent=1 // pred_check
      _
    $region11: #{_lambda_.1} parent=1 // pred_check_branch
      %15 = sbr.rel (0) target = $region13
    $region12: #{_lambda_.1} parent=1 // pred_region
      %s17 = ssub.s32 2048, 2048
      %18 = vsyncadd [#allocation3], %s17
      %s19 = sshll.u32 [#allocation2], 4
      %s20 = int_to_ptr.vmem [resolvable:$true] %s19
      %25 = dma.hbm_to_vmem [thread:$0]  %s2, 2048, %s20, [#allocation3], 128, 128, 8
    $region13: #{_lambda_.1} parent=1 // pred_fallthru
      _
    // Predicated region
    $region14: #{_lambda_.1} parent=1 // pred_check
      _
    $region15: #{_lambda_.1} parent=1 // pred_check_branch
      %27 = sbr.rel (0) target = $region17
    $region16: #{_lambda_.1} parent=1 // pred_region
      _
    $region17: #{_lambda_.1} parent=1 // pred_fallthru
      _
    // Predicated region
    $region18: #{_lambda_.1} parent=1 // pred_check
      _
    $region19: #{_lambda_.1} parent=1 // pred_check_branch
      %29 = sbr.rel (0) target = $region21
    $region20: #{_lambda_.1} parent=1 // pred_region
      %30 = dma.done [#allocation3], 2048
    $region21: #{_lambda_.1} parent=1 // pred_fallthru
      _
    %v31 = vld [vmem:[%s0] sm:$0xff]
    %v32 = vld [vmem:[%s0 + $0x8] sm:$0xff]
    %v33 = vld [vmem:[#allocation2] sm:$0xff]
    %v34 = vld [vmem:[#allocation2 + $0x8] sm:$0xff]
    %v35 = vld [vmem:[#allocation2 + $0x10] sm:$0xff]
    %v36 = vld [vmem:[#allocation2 + $0x18] sm:$0xff]
    %v37 = vld [vmem:[#allocation2 + $0x20] sm:$0xff]
    %v38 = vld [vmem:[#allocation2 + $0x28] sm:$0xff]
    %v39 = vld [vmem:[#allocation2 + $0x30] sm:$0xff]
    %v40 = vld [vmem:[#allocation2 + $0x38] sm:$0xff]
    %v41 = vld [vmem:[#allocation2 + $0x40] sm:$0xff]
    %v42 = vld [vmem:[#allocation2 + $0x48] sm:$0xff]
    %v43 = vld [vmem:[#allocation2 + $0x50] sm:$0xff]
    %v44 = vld [vmem:[#allocation2 + $0x58] sm:$0xff]
    %v45 = vld [vmem:[#allocation2 + $0x60] sm:$0xff]
    %v46 = vld [vmem:[#allocation2 + $0x68] sm:$0xff]
    %v47 = vld [vmem:[#allocation2 + $0x70] sm:$0xff]
    %v48 = vld [vmem:[#allocation2 + $0x78] sm:$0xff]
    %v49 = vld [vmem:[%s3] sm:$0x1]
    %v50 = vld [vmem:[%s3 + $0x1] sm:$0x1]
    %v51 = vld [vmem:[%s3 + $0x2] sm:$0x1]
    %v52 = vlaneseq
    %v53 = vshrl.u32 %v52, 7
    %v54 = vsub.s32 0, %v53
    %v55 = vrot.slane %v49, %v54
    %56 = vmatprep.subr.mxu0 0.0
    %v57 = vand.u32 %v33, 4294901760
    %58 = vmatpush1.msra.mxu0 %v57
    %59 = vmatprep.subr.mxu0 0.0
    %v60 = vand.u32 %v34, 4294901760
    %61 = vmatpush1.msra.mxu0 %v60
    %62 = vmatprep.subr.mxu0 0.0
    %v63 = vand.u32 %v35, 4294901760
    %64 = vmatpush1.msra.mxu0 %v63
    %65 = vmatprep.subr.mxu0 0.0
    %v66 = vand.u32 %v36, 4294901760
    %67 = vmatpush1.msra.mxu0 %v66
    %68 = vmatprep.subr.mxu0 0.0
    %v69 = vand.u32 %v37, 4294901760
    %70 = vmatpush1.msra.mxu0 %v69
    %71 = vmatprep.subr.mxu0 0.0
    %v72 = vand.u32 %v38, 4294901760
    %73 = vmatpush1.msra.mxu0 %v72
    %74 = vmatprep.subr.mxu0 0.0
    %v75 = vand.u32 %v39, 4294901760
    %76 = vmatpush1.msra.mxu0 %v75
    %77 = vmatprep.subr.mxu0 0.0
    %v78 = vand.u32 %v40, 4294901760
    %79 = vmatpush1.msra.mxu0 %v78
    %80 = vmatprep.subr.mxu0 0.0
    %v81 = vand.u32 %v41, 4294901760
    %82 = vmatpush1.msra.mxu0 %v81
    %83 = vmatprep.subr.mxu0 0.0
    %v84 = vand.u32 %v42, 4294901760
    %85 = vmatpush1.msra.mxu0 %v84
    %86 = vmatprep.subr.mxu0 0.0
    %v87 = vand.u32 %v43, 4294901760
    %88 = vmatpush1.msra.mxu0 %v87
    %89 = vmatprep.subr.mxu0 0.0
    %v90 = vand.u32 %v44, 4294901760
    %91 = vmatpush1.msra.mxu0 %v90
    %92 = vmatprep.subr.mxu0 0.0
    %v93 = vand.u32 %v45, 4294901760
    %94 = vmatpush1.msra.mxu0 %v93
    %95 = vmatprep.subr.mxu0 0.0
    %v96 = vand.u32 %v46, 4294901760
    %97 = vmatpush1.msra.mxu0 %v96
    %98 = vmatprep.subr.mxu0 0.0
    %v99 = vand.u32 %v47, 4294901760
    %100 = vmatpush1.msra.mxu0 %v99
    %101 = vmatprep.subr.mxu0 0.0
    %v102 = vand.u32 %v48, 4294901760
    %103 = vmatpush1.msra.mxu0 %v102
    %104 = vmatprep.subr.mxu0 0.0
    %105 = vmatpush1.msra.mxu0 0.0
    %106 = vmatprep.subr.mxu0 0.0
    %107 = vmatpush1.msra.mxu0 0.0
    %108 = vmatprep.subr.mxu0 0.0
    %109 = vmatpush1.msra.mxu0 0.0
    %110 = vmatprep.subr.mxu0 0.0
    %111 = vmatpush1.msra.mxu0 0.0
    %112 = vmatprep.subr.mxu0 0.0
    %113 = vmatpush1.msra.mxu0 0.0
    %114 = vmatprep.subr.mxu0 0.0
    %115 = vmatpush1.msra.mxu0 0.0
    %116 = vmatprep.subr.mxu0 0.0
    %117 = vmatpush1.msra.mxu0 0.0
    %118 = vmatprep.subr.mxu0 0.0
    %119 = vmatpush1.msra.mxu0 0.0
    %120 = vmatprep.subr.mxu0 0.0
    %121 = vmatpush1.msra.mxu0 0.0
    %122 = vmatprep.subr.mxu0 0.0
    %123 = vmatpush1.msra.mxu0 0.0
    %124 = vmatprep.subr.mxu0 0.0
    %125 = vmatpush1.msra.mxu0 0.0
    %126 = vmatprep.subr.mxu0 0.0
    %127 = vmatpush1.msra.mxu0 0.0
    %128 = vmatprep.subr.mxu0 0.0
    %129 = vmatpush1.msra.mxu0 0.0
    %130 = vmatprep.subr.mxu0 0.0
    %131 = vmatpush1.msra.mxu0 0.0
    %132 = vmatprep.subr.mxu0 0.0
    %133 = vmatpush1.msra.mxu0 0.0
    %134 = vmatprep.subr.mxu0 0.0
    %135 = vmatpush1.msra.mxu0 0.0
    %136 = vmatprep.mubr.f32.mxu0 0.0
    %v137 = vand.u32 %v31, 4294901760
    %v138 = vsub.f32 %v31, %v137
    %v139 = vand.u32 %v138, 4294901760
    %v140 = vsub.f32 %v138, %v139
    %v141 = vand.u32 %v140, 4294901760
    %142 = vmatmul.mubr.f32.gmra.mrb[0].mxu0 %v141
    %v143 = vpop.f32.mrb[0].mxu0
    %v144 = vadd.f32 %v55, %v143
    %v145 = vpop.f32.mrb[0].mxu0
    %146 = vmatprep.mubr.f32.mxu0 0.0
    %v147 = vand.u32 %v32, 4294901760
    %v148 = vsub.f32 %v32, %v147
    %v149 = vand.u32 %v148, 4294901760
    %v150 = vsub.f32 %v148, %v149
    %v151 = vand.u32 %v150, 4294901760
    %152 = vmatmul.mubr.f32.gmra.mrb[0].mxu0 %v151
    %v153 = vpop.f32.mrb[0].mxu0
    %v154 = vadd.f32 %v55, %v153
    %v155 = vpop.f32.mrb[0].mxu0
    %156 = vdwg.mxu0
    %157 = vmatprep.subr.mxu0 0.0
    %v158 = vand.u32 %v33, 4294901760
    %v159 = vsub.f32 %v33, %v158
    %v160 = vand.u32 %v159, 4294901760
    %v161 = vsub.f32 %v159, %v160
    %v162 = vand.u32 %v161, 4294901760
    %163 = vmatpush1.msra.mxu0 %v162
    %164 = vmatprep.subr.mxu0 0.0
    %v165 = vand.u32 %v34, 4294901760
    %v166 = vsub.f32 %v34, %v165
    %v167 = vand.u32 %v166, 4294901760
    %v168 = vsub.f32 %v166, %v167
    %v169 = vand.u32 %v168, 4294901760
    %170 = vmatpush1.msra.mxu0 %v169
    %171 = vmatprep.subr.mxu0 0.0
    %v172 = vand.u32 %v35, 4294901760
    %v173 = vsub.f32 %v35, %v172
    %v174 = vand.u32 %v173, 4294901760
    %v175 = vsub.f32 %v173, %v174
    %v176 = vand.u32 %v175, 4294901760
    %177 = vmatpush1.msra.mxu0 %v176
    %178 = vmatprep.subr.mxu0 0.0
    %v179 = vand.u32 %v36, 4294901760
    %v180 = vsub.f32 %v36, %v179
    %v181 = vand.u32 %v180, 4294901760
    %v182 = vsub.f32 %v180, %v181
    %v183 = vand.u32 %v182, 4294901760
    %184 = vmatpush1.msra.mxu0 %v183
    %185 = vmatprep.subr.mxu0 0.0
    %v186 = vand.u32 %v37, 4294901760
    %v187 = vsub.f32 %v37, %v186
    %v188 = vand.u32 %v187, 4294901760
    %v189 = vsub.f32 %v187, %v188
    %v190 = vand.u32 %v189, 4294901760
    %191 = vmatpush1.msra.mxu0 %v190
    %192 = vmatprep.subr.mxu0 0.0
    %v193 = vand.u32 %v38, 4294901760
    %v194 = vsub.f32 %v38, %v193
    %v195 = vand.u32 %v194, 4294901760
    %v196 = vsub.f32 %v194, %v195
    %v197 = vand.u32 %v196, 4294901760
    %198 = vmatpush1.msra.mxu0 %v197
    %199 = vmatprep.subr.mxu0 0.0
    %v200 = vand.u32 %v39, 4294901760
    %v201 = vsub.f32 %v39, %v200
    %v202 = vand.u32 %v201, 4294901760
    %v203 = vsub.f32 %v201, %v202
    %v204 = vand.u32 %v203, 4294901760
    %205 = vmatpush1.msra.mxu0 %v204
    %206 = vmatprep.subr.mxu0 0.0
    %v207 = vand.u32 %v40, 4294901760
    %v208 = vsub.f32 %v40, %v207
    %v209 = vand.u32 %v208, 4294901760
    %v210 = vsub.f32 %v208, %v209
    %v211 = vand.u32 %v210, 4294901760
    %212 = vmatpush1.msra.mxu0 %v211
    %213 = vmatprep.subr.mxu0 0.0
    %v214 = vand.u32 %v41, 4294901760
    %v215 = vsub.f32 %v41, %v214
    %v216 = vand.u32 %v215, 4294901760
    %v217 = vsub.f32 %v215, %v216
    %v218 = vand.u32 %v217, 4294901760
    %219 = vmatpush1.msra.mxu0 %v218
    %220 = vmatprep.subr.mxu0 0.0
    %v221 = vand.u32 %v42, 4294901760
    %v222 = vsub.f32 %v42, %v221
    %v223 = vand.u32 %v222, 4294901760
    %v224 = vsub.f32 %v222, %v223
    %v225 = vand.u32 %v224, 4294901760
    %226 = vmatpush1.msra.mxu0 %v225
    %227 = vmatprep.subr.mxu0 0.0
    %v228 = vand.u32 %v43, 4294901760
    %v229 = vsub.f32 %v43, %v228
    %v230 = vand.u32 %v229, 4294901760
    %v231 = vsub.f32 %v229, %v230
    %v232 = vand.u32 %v231, 4294901760
    %233 = vmatpush1.msra.mxu0 %v232
    %234 = vmatprep.subr.mxu0 0.0
    %v235 = vand.u32 %v44, 4294901760
    %v236 = vsub.f32 %v44, %v235
    %v237 = vand.u32 %v236, 4294901760
    %v238 = vsub.f32 %v236, %v237
    %v239 = vand.u32 %v238, 4294901760
    %240 = vmatpush1.msra.mxu0 %v239
    %241 = vmatprep.subr.mxu0 0.0
    %v242 = vand.u32 %v45, 4294901760
    %v243 = vsub.f32 %v45, %v242
    %v244 = vand.u32 %v243, 4294901760
    %v245 = vsub.f32 %v243, %v244
    %v246 = vand.u32 %v245, 4294901760
    %247 = vmatpush1.msra.mxu0 %v246
    %248 = vmatprep.subr.mxu0 0.0
    %v249 = vand.u32 %v46, 4294901760
    %v250 = vsub.f32 %v46, %v249
    %v251 = vand.u32 %v250, 4294901760
    %v252 = vsub.f32 %v250, %v251
    %v253 = vand.u32 %v252, 4294901760
    %254 = vmatpush1.msra.mxu0 %v253
    %255 = vmatprep.subr.mxu0 0.0
    %v256 = vand.u32 %v47, 4294901760
    %v257 = vsub.f32 %v47, %v256
    %v258 = vand.u32 %v257, 4294901760
    %v259 = vsub.f32 %v257, %v258
    %v260 = vand.u32 %v259, 4294901760
    %261 = vmatpush1.msra.mxu0 %v260
    %262 = vmatprep.subr.mxu0 0.0
    %v263 = vand.u32 %v48, 4294901760
    %v264 = vsub.f32 %v48, %v263
    %v265 = vand.u32 %v264, 4294901760
    %v266 = vsub.f32 %v264, %v265
    %v267 = vand.u32 %v266, 4294901760
    %268 = vmatpush1.msra.mxu0 %v267
    %269 = vmatprep.subr.mxu0 0.0
    %270 = vmatpush1.msra.mxu0 0.0
    %271 = vmatprep.subr.mxu0 0.0
    %272 = vmatpush1.msra.mxu0 0.0
    %273 = vmatprep.subr.mxu0 0.0
    %274 = vmatpush1.msra.mxu0 0.0
    %275 = vmatprep.subr.mxu0 0.0
    %276 = vmatpush1.msra.mxu0 0.0
    %277 = vmatprep.subr.mxu0 0.0
    %278 = vmatpush1.msra.mxu0 0.0
    %279 = vmatprep.subr.mxu0 0.0
    %280 = vmatpush1.msra.mxu0 0.0
    %281 = vmatprep.subr.mxu0 0.0
    %282 = vmatpush1.msra.mxu0 0.0
    %283 = vmatprep.subr.mxu0 0.0
    %284 = vmatpush1.msra.mxu0 0.0
    %285 = vmatprep.subr.mxu0 0.0
    %286 = vmatpush1.msra.mxu0 0.0
    %287 = vmatprep.subr.mxu0 0.0
    %288 = vmatpush1.msra.mxu0 0.0
    %289 = vmatprep.subr.mxu0 0.0
    %290 = vmatpush1.msra.mxu0 0.0
    %291 = vmatprep.subr.mxu0 0.0
    %292 = vmatpush1.msra.mxu0 0.0
    %293 = vmatprep.subr.mxu0 0.0
    %294 = vmatpush1.msra.mxu0 0.0
    %295 = vmatprep.subr.mxu0 0.0
    %296 = vmatpush1.msra.mxu0 0.0
    %297 = vmatprep.subr.mxu0 0.0
    %298 = vmatpush1.msra.mxu0 0.0
    %299 = vmatprep.subr.mxu0 0.0
    %300 = vmatpush1.msra.mxu0 0.0
    %301 = vmatprep.mubr.f32.mxu0 0.0
    %v302 = vand.u32 %v31, 4294901760
    %303 = vmatmul.mubr.f32.gmra.mrb[0].mxu0 %v302
    %v304 = vpop.f32.mrb[0].mxu0
    %v305 = vadd.f32 %v144, %v304
    %v306 = vpop.f32.mrb[0].mxu0
    %307 = vmatprep.mubr.f32.mxu0 0.0
    %v308 = vand.u32 %v32, 4294901760
    %309 = vmatmul.mubr.f32.gmra.mrb[0].mxu0 %v308
    %v310 = vpop.f32.mrb[0].mxu0
    %v311 = vadd.f32 %v154, %v310
    %v312 = vpop.f32.mrb[0].mxu0
    %313 = vdwg.mxu0
    %314 = vmatprep.subr.mxu0 0.0
    %v315 = vand.u32 %v33, 4294901760
    %v316 = vsub.f32 %v33, %v315
    %317 = vmatpush1.msra.mxu0 %v316
    %318 = vmatprep.subr.mxu0 0.0
    %v319 = vand.u32 %v34, 4294901760
    %v320 = vsub.f32 %v34, %v319
    %321 = vmatpush1.msra.mxu0 %v320
    %322 = vmatprep.subr.mxu0 0.0
    %v323 = vand.u32 %v35, 4294901760
    %v324 = vsub.f32 %v35, %v323
    %325 = vmatpush1.msra.mxu0 %v324
    %326 = vmatprep.subr.mxu0 0.0
    %v327 = vand.u32 %v36, 4294901760
    %v328 = vsub.f32 %v36, %v327
    %329 = vmatpush1.msra.mxu0 %v328
    %330 = vmatprep.subr.mxu0 0.0
    %v331 = vand.u32 %v37, 4294901760
    %v332 = vsub.f32 %v37, %v331
    %333 = vmatpush1.msra.mxu0 %v332
    %334 = vmatprep.subr.mxu0 0.0
    %v335 = vand.u32 %v38, 4294901760
    %v336 = vsub.f32 %v38, %v335
    %337 = vmatpush1.msra.mxu0 %v336
    %338 = vmatprep.subr.mxu0 0.0
    %v339 = vand.u32 %v39, 4294901760
    %v340 = vsub.f32 %v39, %v339
    %341 = vmatpush1.msra.mxu0 %v340
    %342 = vmatprep.subr.mxu0 0.0
    %v343 = vand.u32 %v40, 4294901760
    %v344 = vsub.f32 %v40, %v343
    %345 = vmatpush1.msra.mxu0 %v344
    %346 = vmatprep.subr.mxu0 0.0
    %v347 = vand.u32 %v41, 4294901760
    %v348 = vsub.f32 %v41, %v347
    %349 = vmatpush1.msra.mxu0 %v348
    %350 = vmatprep.subr.mxu0 0.0
    %v351 = vand.u32 %v42, 4294901760
    %v352 = vsub.f32 %v42, %v351
    %353 = vmatpush1.msra.mxu0 %v352
    %354 = vmatprep.subr.mxu0 0.0
    %v355 = vand.u32 %v43, 4294901760
    %v356 = vsub.f32 %v43, %v355
    %357 = vmatpush1.msra.mxu0 %v356
    %358 = vmatprep.subr.mxu0 0.0
    %v359 = vand.u32 %v44, 4294901760
    %v360 = vsub.f32 %v44, %v359
    %361 = vmatpush1.msra.mxu0 %v360
    %362 = vmatprep.subr.mxu0 0.0
    %v363 = vand.u32 %v45, 4294901760
    %v364 = vsub.f32 %v45, %v363
    %365 = vmatpush1.msra.mxu0 %v364
    %366 = vmatprep.subr.mxu0 0.0
    %v367 = vand.u32 %v46, 4294901760
    %v368 = vsub.f32 %v46, %v367
    %369 = vmatpush1.msra.mxu0 %v368
    %370 = vmatprep.subr.mxu0 0.0
    %v371 = vand.u32 %v47, 4294901760
    %v372 = vsub.f32 %v47, %v371
    %373 = vmatpush1.msra.mxu0 %v372
    %374 = vmatprep.subr.mxu0 0.0
    %v375 = vand.u32 %v48, 4294901760
    %v376 = vsub.f32 %v48, %v375
    %377 = vmatpush1.msra.mxu0 %v376
    %378 = vmatprep.subr.mxu0 0.0
    %379 = vmatpush1.msra.mxu0 0.0
    %380 = vmatprep.subr.mxu0 0.0
    %381 = vmatpush1.msra.mxu0 0.0
    %382 = vmatprep.subr.mxu0 0.0
    %383 = vmatpush1.msra.mxu0 0.0
    %384 = vmatprep.subr.mxu0 0.0
    %385 = vmatpush1.msra.mxu0 0.0
    %386 = vmatprep.subr.mxu0 0.0
    %387 = vmatpush1.msra.mxu0 0.0
    %388 = vmatprep.subr.mxu0 0.0
    %389 = vmatpush1.msra.mxu0 0.0
    %390 = vmatprep.subr.mxu0 0.0
    %391 = vmatpush1.msra.mxu0 0.0
    %392 = vmatprep.subr.mxu0 0.0
    %393 = vmatpush1.msra.mxu0 0.0
    %394 = vmatprep.subr.mxu0 0.0
    %395 = vmatpush1.msra.mxu0 0.0
    %396 = vmatprep.subr.mxu0 0.0
    %397 = vmatpush1.msra.mxu0 0.0
    %398 = vmatprep.subr.mxu0 0.0
    %399 = vmatpush1.msra.mxu0 0.0
    %400 = vmatprep.subr.mxu0 0.0
    %401 = vmatpush1.msra.mxu0 0.0
    %402 = vmatprep.subr.mxu0 0.0
    %403 = vmatpush1.msra.mxu0 0.0
    %404 = vmatprep.subr.mxu0 0.0
    %405 = vmatpush1.msra.mxu0 0.0
    %406 = vmatprep.subr.mxu0 0.0
    %407 = vmatpush1.msra.mxu0 0.0
    %408 = vmatprep.subr.mxu0 0.0
    %409 = vmatpush1.msra.mxu0 0.0
    %410 = vmatprep.mubr.f32.mxu0 0.0
    %v411 = vand.u32 %v31, 4294901760
    %v412 = vsub.f32 %v31, %v411
    %413 = vmatmul.mubr.f32.gmra.mrb[0].mxu0 %v412
    %v414 = vpop.f32.mrb[0].mxu0
    %v415 = vadd.f32 %v305, %v414
    %v416 = vpop.f32.mrb[0].mxu0
    %417 = vmatprep.mubr.f32.mxu0 0.0
    %v418 = vand.u32 %v32, 4294901760
    %v419 = vsub.f32 %v32, %v418
    %420 = vmatmul.mubr.f32.gmra.mrb[0].mxu0 %v419
    %v421 = vpop.f32.mrb[0].mxu0
    %v422 = vadd.f32 %v311, %v421
    %v423 = vpop.f32.mrb[0].mxu0
    %424 = vdwg.mxu0
    %425 = vmatprep.subr.mxu0 0.0
    %v426 = vand.u32 %v33, 4294901760
    %427 = vmatpush1.msra.mxu0 %v426
    %428 = vmatprep.subr.mxu0 0.0
    %v429 = vand.u32 %v34, 4294901760
    %430 = vmatpush1.msra.mxu0 %v429
    %431 = vmatprep.subr.mxu0 0.0
    %v432 = vand.u32 %v35, 4294901760
    %433 = vmatpush1.msra.mxu0 %v432
    %434 = vmatprep.subr.mxu0 0.0
    %v435 = vand.u32 %v36, 4294901760
    %436 = vmatpush1.msra.mxu0 %v435
    %437 = vmatprep.subr.mxu0 0.0
    %v438 = vand.u32 %v37, 4294901760
    %439 = vmatpush1.msra.mxu0 %v438
    %440 = vmatprep.subr.mxu0 0.0
    %v441 = vand.u32 %v38, 4294901760
    %442 = vmatpush1.msra.mxu0 %v441
    %443 = vmatprep.subr.mxu0 0.0
    %v444 = vand.u32 %v39, 4294901760
    %445 = vmatpush1.msra.mxu0 %v444
    %446 = vmatprep.subr.mxu0 0.0
    %v447 = vand.u32 %v40, 4294901760
    %448 = vmatpush1.msra.mxu0 %v447
    %449 = vmatprep.subr.mxu0 0.0
    %v450 = vand.u32 %v41, 4294901760
    %451 = vmatpush1.msra.mxu0 %v450
    %452 = vmatprep.subr.mxu0 0.0
    %v453 = vand.u32 %v42, 4294901760
    %454 = vmatpush1.msra.mxu0 %v453
    %455 = vmatprep.subr.mxu0 0.0
    %v456 = vand.u32 %v43, 4294901760
    %457 = vmatpush1.msra.mxu0 %v456
    %458 = vmatprep.subr.mxu0 0.0
    %v459 = vand.u32 %v44, 4294901760
    %460 = vmatpush1.msra.mxu0 %v459
    %461 = vmatprep.subr.mxu0 0.0
    %v462 = vand.u32 %v45, 4294901760
    %463 = vmatpush1.msra.mxu0 %v462
    %464 = vmatprep.subr.mxu0 0.0
    %v465 = vand.u32 %v46, 4294901760
    %466 = vmatpush1.msra.mxu0 %v465
    %467 = vmatprep.subr.mxu0 0.0
    %v468 = vand.u32 %v47, 4294901760
    %469 = vmatpush1.msra.mxu0 %v468
    %470 = vmatprep.subr.mxu0 0.0
    %v471 = vand.u32 %v48, 4294901760
    %472 = vmatpush1.msra.mxu0 %v471
    %473 = vmatprep.subr.mxu0 0.0
    %474 = vmatpush1.msra.mxu0 0.0
    %475 = vmatprep.subr.mxu0 0.0
    %476 = vmatpush1.msra.mxu0 0.0
    %477 = vmatprep.subr.mxu0 0.0
    %478 = vmatpush1.msra.mxu0 0.0
    %479 = vmatprep.subr.mxu0 0.0
    %480 = vmatpush1.msra.mxu0 0.0
    %481 = vmatprep.subr.mxu0 0.0
    %482 = vmatpush1.msra.mxu0 0.0
    %483 = vmatprep.subr.mxu0 0.0
    %484 = vmatpush1.msra.mxu0 0.0
    %485 = vmatprep.subr.mxu0 0.0
    %486 = vmatpush1.msra.mxu0 0.0
    %487 = vmatprep.subr.mxu0 0.0
    %488 = vmatpush1.msra.mxu0 0.0
    %489 = vmatprep.subr.mxu0 0.0
    %490 = vmatpush1.msra.mxu0 0.0
    %491 = vmatprep.subr.mxu0 0.0
    %492 = vmatpush1.msra.mxu0 0.0
    %493 = vmatprep.subr.mxu0 0.0
    %494 = vmatpush1.msra.mxu0 0.0
    %495 = vmatprep.subr.mxu0 0.0
    %496 = vmatpush1.msra.mxu0 0.0
    %497 = vmatprep.subr.mxu0 0.0
    %498 = vmatpush1.msra.mxu0 0.0
    %499 = vmatprep.subr.mxu0 0.0
    %500 = vmatpush1.msra.mxu0 0.0
    %501 = vmatprep.subr.mxu0 0.0
    %502 = vmatpush1.msra.mxu0 0.0
    %503 = vmatprep.subr.mxu0 0.0
    %504 = vmatpush1.msra.mxu0 0.0
    %505 = vmatprep.mubr.f32.mxu0 0.0
    %v506 = vand.u32 %v31, 4294901760
    %v507 = vsub.f32 %v31, %v506
    %v508 = vand.u32 %v507, 4294901760
    %509 = vmatmul.mubr.f32.gmra.mrb[0].mxu0 %v508
    %v510 = vpop.f32.mrb[0].mxu0
    %v511 = vadd.f32 %v415, %v510
    %v512 = vpop.f32.mrb[0].mxu0
    %513 = vmatprep.mubr.f32.mxu0 0.0
    %v514 = vand.u32 %v32, 4294901760
    %v515 = vsub.f32 %v32, %v514
    %v516 = vand.u32 %v515, 4294901760
    %517 = vmatmul.mubr.f32.gmra.mrb[0].mxu0 %v516
    %v518 = vpop.f32.mrb[0].mxu0
    %v519 = vadd.f32 %v422, %v518
    %v520 = vpop.f32.mrb[0].mxu0
    %521 = vdwg.mxu0
    %522 = vmatprep.subr.mxu0 0.0
    %v523 = vand.u32 %v33, 4294901760
    %v524 = vsub.f32 %v33, %v523
    %v525 = vand.u32 %v524, 4294901760
    %526 = vmatpush1.msra.mxu0 %v525
    %527 = vmatprep.subr.mxu0 0.0
    %v528 = vand.u32 %v34, 4294901760
    %v529 = vsub.f32 %v34, %v528
    %v530 = vand.u32 %v529, 4294901760
    %531 = vmatpush1.msra.mxu0 %v530
    %532 = vmatprep.subr.mxu0 0.0
    %v533 = vand.u32 %v35, 4294901760
    %v534 = vsub.f32 %v35, %v533
    %v535 = vand.u32 %v534, 4294901760
    %536 = vmatpush1.msra.mxu0 %v535
    %537 = vmatprep.subr.mxu0 0.0
    %v538 = vand.u32 %v36, 4294901760
    %v539 = vsub.f32 %v36, %v538
    %v540 = vand.u32 %v539, 4294901760
    %541 = vmatpush1.msra.mxu0 %v540
    %542 = vmatprep.subr.mxu0 0.0
    %v543 = vand.u32 %v37, 4294901760
    %v544 = vsub.f32 %v37, %v543
    %v545 = vand.u32 %v544, 4294901760
    %546 = vmatpush1.msra.mxu0 %v545
    %547 = vmatprep.subr.mxu0 0.0
    %v548 = vand.u32 %v38, 4294901760
    %v549 = vsub.f32 %v38, %v548
    %v550 = vand.u32 %v549, 4294901760
    %551 = vmatpush1.msra.mxu0 %v550
    %552 = vmatprep.subr.mxu0 0.0
    %v553 = vand.u32 %v39, 4294901760
    %v554 = vsub.f32 %v39, %v553
    %v555 = vand.u32 %v554, 4294901760
    %556 = vmatpush1.msra.mxu0 %v555
    %557 = vmatprep.subr.mxu0 0.0
    %v558 = vand.u32 %v40, 4294901760
    %v559 = vsub.f32 %v40, %v558
    %v560 = vand.u32 %v559, 4294901760
    %561 = vmatpush1.msra.mxu0 %v560
    %562 = vmatprep.subr.mxu0 0.0
    %v563 = vand.u32 %v41, 4294901760
    %v564 = vsub.f32 %v41, %v563
    %v565 = vand.u32 %v564, 4294901760
    %566 = vmatpush1.msra.mxu0 %v565
    %567 = vmatprep.subr.mxu0 0.0
    %v568 = vand.u32 %v42, 4294901760
    %v569 = vsub.f32 %v42, %v568
    %v570 = vand.u32 %v569, 4294901760
    %571 = vmatpush1.msra.mxu0 %v570
    %572 = vmatprep.subr.mxu0 0.0
    %v573 = vand.u32 %v43, 4294901760
    %v574 = vsub.f32 %v43, %v573
    %v575 = vand.u32 %v574, 4294901760
    %576 = vmatpush1.msra.mxu0 %v575
    %577 = vmatprep.subr.mxu0 0.0
    %v578 = vand.u32 %v44, 4294901760
    %v579 = vsub.f32 %v44, %v578
    %v580 = vand.u32 %v579, 4294901760
    %581 = vmatpush1.msra.mxu0 %v580
    %582 = vmatprep.subr.mxu0 0.0
    %v583 = vand.u32 %v45, 4294901760
    %v584 = vsub.f32 %v45, %v583
    %v585 = vand.u32 %v584, 4294901760
    %586 = vmatpush1.msra.mxu0 %v585
    %587 = vmatprep.subr.mxu0 0.0
    %v588 = vand.u32 %v46, 4294901760
    %v589 = vsub.f32 %v46, %v588
    %v590 = vand.u32 %v589, 4294901760
    %591 = vmatpush1.msra.mxu0 %v590
    %592 = vmatprep.subr.mxu0 0.0
    %v593 = vand.u32 %v47, 4294901760
    %v594 = vsub.f32 %v47, %v593
    %v595 = vand.u32 %v594, 4294901760
    %596 = vmatpush1.msra.mxu0 %v595
    %597 = vmatprep.subr.mxu0 0.0
    %v598 = vand.u32 %v48, 4294901760
    %v599 = vsub.f32 %v48, %v598
    %v600 = vand.u32 %v599, 4294901760
    %601 = vmatpush1.msra.mxu0 %v600
    %602 = vmatprep.subr.mxu0 0.0
    %603 = vmatpush1.msra.mxu0 0.0
    %604 = vmatprep.subr.mxu0 0.0
    %605 = vmatpush1.msra.mxu0 0.0
    %606 = vmatprep.subr.mxu0 0.0
    %607 = vmatpush1.msra.mxu0 0.0
    %608 = vmatprep.subr.mxu0 0.0
    %609 = vmatpush1.msra.mxu0 0.0
    %610 = vmatprep.subr.mxu0 0.0
    %611 = vmatpush1.msra.mxu0 0.0
    %612 = vmatprep.subr.mxu0 0.0
    %613 = vmatpush1.msra.mxu0 0.0
    %614 = vmatprep.subr.mxu0 0.0
    %615 = vmatpush1.msra.mxu0 0.0
    %616 = vmatprep.subr.mxu0 0.0
    %617 = vmatpush1.msra.mxu0 0.0
    %618 = vmatprep.subr.mxu0 0.0
    %619 = vmatpush1.msra.mxu0 0.0
    %620 = vmatprep.subr.mxu0 0.0
    %621 = vmatpush1.msra.mxu0 0.0
    %622 = vmatprep.subr.mxu0 0.0
    %623 = vmatpush1.msra.mxu0 0.0
    %624 = vmatprep.subr.mxu0 0.0
    %625 = vmatpush1.msra.mxu0 0.0
    %626 = vmatprep.subr.mxu0 0.0
    %627 = vmatpush1.msra.mxu0 0.0
    %628 = vmatprep.subr.mxu0 0.0
    %629 = vmatpush1.msra.mxu0 0.0
    %630 = vmatprep.subr.mxu0 0.0
    %631 = vmatpush1.msra.mxu0 0.0
    %632 = vmatprep.subr.mxu0 0.0
    %633 = vmatpush1.msra.mxu0 0.0
    %634 = vmatprep.mubr.f32.mxu0 0.0
    %v635 = vand.u32 %v31, 4294901760
    %636 = vmatmul.mubr.f32.gmra.mrb[0].mxu0 %v635
    %v637 = vpop.f32.mrb[0].mxu0
    %v638 = vadd.f32 %v511, %v637
    %v639 = vpop.f32.mrb[0].mxu0
    %640 = vmatprep.mubr.f32.mxu0 0.0
    %v641 = vand.u32 %v32, 4294901760
    %642 = vmatmul.mubr.f32.gmra.mrb[0].mxu0 %v641
    %v643 = vpop.f32.mrb[0].mxu0
    %v644 = vadd.f32 %v519, %v643
    %v645 = vpop.f32.mrb[0].mxu0
    %646 = vdwg.mxu0
    %647 = vmatprep.subr.mxu0 0.0
    %v648 = vand.u32 %v33, 4294901760
    %649 = vmatpush1.msra.mxu0 %v648
    %650 = vmatprep.subr.mxu0 0.0
    %v651 = vand.u32 %v34, 4294901760
    %652 = vmatpush1.msra.mxu0 %v651
    %653 = vmatprep.subr.mxu0 0.0
    %v654 = vand.u32 %v35, 4294901760
    %655 = vmatpush1.msra.mxu0 %v654
    %656 = vmatprep.subr.mxu0 0.0
    %v657 = vand.u32 %v36, 4294901760
    %658 = vmatpush1.msra.mxu0 %v657
    %659 = vmatprep.subr.mxu0 0.0
    %v660 = vand.u32 %v37, 4294901760
    %661 = vmatpush1.msra.mxu0 %v660
    %662 = vmatprep.subr.mxu0 0.0
    %v663 = vand.u32 %v38, 4294901760
    %664 = vmatpush1.msra.mxu0 %v663
    %665 = vmatprep.subr.mxu0 0.0
    %v666 = vand.u32 %v39, 4294901760
    %667 = vmatpush1.msra.mxu0 %v666
    %668 = vmatprep.subr.mxu0 0.0
    %v669 = vand.u32 %v40, 4294901760
    %670 = vmatpush1.msra.mxu0 %v669
    %671 = vmatprep.subr.mxu0 0.0
    %v672 = vand.u32 %v41, 4294901760
    %673 = vmatpush1.msra.mxu0 %v672
    %674 = vmatprep.subr.mxu0 0.0
    %v675 = vand.u32 %v42, 4294901760
    %676 = vmatpush1.msra.mxu0 %v675
    %677 = vmatprep.subr.mxu0 0.0
    %v678 = vand.u32 %v43, 4294901760
    %679 = vmatpush1.msra.mxu0 %v678
    %680 = vmatprep.subr.mxu0 0.0
    %v681 = vand.u32 %v44, 4294901760
    %682 = vmatpush1.msra.mxu0 %v681
    %683 = vmatprep.subr.mxu0 0.0
    %v684 = vand.u32 %v45, 4294901760
    %685 = vmatpush1.msra.mxu0 %v684
    %686 = vmatprep.subr.mxu0 0.0
    %v687 = vand.u32 %v46, 4294901760
    %688 = vmatpush1.msra.mxu0 %v687
    %689 = vmatprep.subr.mxu0 0.0
    %v690 = vand.u32 %v47, 4294901760
    %691 = vmatpush1.msra.mxu0 %v690
    %692 = vmatprep.subr.mxu0 0.0
    %v693 = vand.u32 %v48, 4294901760
    %694 = vmatpush1.msra.mxu0 %v693
    %695 = vmatprep.subr.mxu0 0.0
    %696 = vmatpush1.msra.mxu0 0.0
    %697 = vmatprep.subr.mxu0 0.0
    %698 = vmatpush1.msra.mxu0 0.0
    %699 = vmatprep.subr.mxu0 0.0
    %700 = vmatpush1.msra.mxu0 0.0
    %701 = vmatprep.subr.mxu0 0.0
    %702 = vmatpush1.msra.mxu0 0.0
    %703 = vmatprep.subr.mxu0 0.0
    %704 = vmatpush1.msra.mxu0 0.0
    %705 = vmatprep.subr.mxu0 0.0
    %706 = vmatpush1.msra.mxu0 0.0
    %707 = vmatprep.subr.mxu0 0.0
    %708 = vmatpush1.msra.mxu0 0.0
    %709 = vmatprep.subr.mxu0 0.0
    %710 = vmatpush1.msra.mxu0 0.0
    %711 = vmatprep.subr.mxu0 0.0
    %712 = vmatpush1.msra.mxu0 0.0
    %713 = vmatprep.subr.mxu0 0.0
    %714 = vmatpush1.msra.mxu0 0.0
    %715 = vmatprep.subr.mxu0 0.0
    %716 = vmatpush1.msra.mxu0 0.0
    %717 = vmatprep.subr.mxu0 0.0
    %718 = vmatpush1.msra.mxu0 0.0
    %719 = vmatprep.subr.mxu0 0.0
    %720 = vmatpush1.msra.mxu0 0.0
    %721 = vmatprep.subr.mxu0 0.0
    %722 = vmatpush1.msra.mxu0 0.0
    %723 = vmatprep.subr.mxu0 0.0
    %724 = vmatpush1.msra.mxu0 0.0
    %725 = vmatprep.subr.mxu0 0.0
    %726 = vmatpush1.msra.mxu0 0.0
    %727 = vmatprep.mubr.f32.mxu0 0.0
    %v728 = vand.u32 %v31, 4294901760
    %729 = vmatmul.mubr.f32.gmra.mrb[0].mxu0 %v728
    %v730 = vpop.f32.mrb[0].mxu0
    %v731 = vadd.f32 %v638, %v730
    %v732 = vpop.f32.mrb[0].mxu0
    %733 = vmatprep.mubr.f32.mxu0 0.0
    %v734 = vand.u32 %v32, 4294901760
    %735 = vmatmul.mubr.f32.gmra.mrb[0].mxu0 %v734
    %v736 = vpop.f32.mrb[0].mxu0
    %v737 = vadd.f32 %v644, %v736
    %v738 = vpop.f32.mrb[0].mxu0
    %739 = vdwg.mxu0
    %v740 = vld [vmem:[%s1] sm:$0xff]
    %v741 = vld [vmem:[%s1 + $0x8] sm:$0xff]
    %v742 = vadd.f32 %v731, %v740
    %v743 = vadd.f32 %v737, %v741
    %744 = vadd.xlane.f32.xlu0 %v742
    %v745 = vpop.xlane.xlu0 %744
    %746 = vadd.xlane.f32.xlu0 %v743
    %v747 = vpop.xlane.xlu0 %746
    %v748 = vmul.f32 %v742, %v742
    %v749 = vmul.f32 %v743, %v743
    %750 = vadd.xlane.f32.xlu0 %v748
    %v751 = vpop.xlane.xlu0 %750
    %752 = vadd.xlane.f32.xlu0 %v749
    %v753 = vpop.xlane.xlu0 %752
    %v754 = vmul.f32 %v745, 0.03125
    %v755 = vmul.f32 %v747, 0.03125
    %v756 = vmul.f32 %v751, 0.03125
    %v757 = vmul.f32 %v753, 0.03125
    %v758 = vmul.f32 %v754, %v754
    %v759 = vmul.f32 %v755, %v755
    %v760 = vsub.f32 %v756, %v758
    %v761 = vsub.f32 %v757, %v759
    %v762 = vmax.f32 %v760, 0.0
    %v763 = vmax.f32 %v761, 0.0
    %v764 = vsub.f32 %v742, %v754
    %v765 = vsub.f32 %v743, %v755
    %v766 = vadd.f32 %v762, 1e-12
    %v767 = vadd.f32 %v763, 1e-12
    %v768 = vrsqrt.pop %v766
    %v769 = vrsqrt.pop %v767
    %v770 = vmul.f32 %v764, %v768
    %v771 = vmul.f32 %v765, %v769
    %v772 = vlaneseq
    %v773 = vshrl.u32 %v772, 7
    %v774 = vsub.s32 0, %v773
    %v775 = vrot.slane %v50, %v774
    %v776 = vmul.f32 %v770, %v775
    %v777 = vmul.f32 %v771, %v775
    %v778 = vlaneseq
    %v779 = vshrl.u32 %v778, 7
    %v780 = vsub.s32 0, %v779
    %v781 = vrot.slane %v51, %v780
    %v782 = vadd.f32 %v776, %v781
    %v783 = vadd.f32 %v777, %v781
    %784 = vst [vmem:[%s4] sm:$0xff] %v782
    %785 = vst [vmem:[%s4 + $0x8] sm:$0xff] %v783
    // Predicated region
    $region22: #{_lambda_.1} parent=1 // pred_check
      _
    $region23: #{_lambda_.1} parent=1 // pred_check_branch
      %787 = sbr.rel (0) target = $region25
    $region24: #{_lambda_.1} parent=1 // pred_region
      _
    $region25: #{_lambda_.1} parent=1 // pred_fallthru
      _
    // Predicated region
    $region26: #{_lambda_.1} parent=1 // pred_check
      _
    $region27: #{_lambda_.1} parent=1 // pred_check_branch
      %789 = sbr.rel (0) target = $region29
    $region28: #{_lambda_.1} parent=1 // pred_region
      _
    $region29: #{_lambda_.1} parent=1 // pred_fallthru
      _
    %790 = vsyncpa [#allocation3], 1

</llo_original>
